<compile_context>
chip_gen: v6e
topology: v6e:2x2x1
jax: 0.10.0
libtpu: 0.0.40
codegen_flags: <defaults>
</compile_context>

<pallas_src>
import functools

import jax
import jax.numpy as jnp
from jax.experimental import pallas as pl
from jax.experimental.pallas import tpu as pltpu

# Python floats only -- module-level jnp arrays would be captured as kernel constants.
NEG_BIG = -1e30
LEAKY_SLOPE = 0.2


# --------------------------------------------------------------------------------------
# Stage A: per-layer feature transform (row-tiled, fully parallel grid).
#   h  = x @ W                (all heads in one MXU matmul, f32 x f32 -> f32)
#   s  = h @ a_mat            (packed per-head [a_src | a_dst] scores)
# Outputs: h head-major [H, N, C], s node-major [N, 2H].
# --------------------------------------------------------------------------------------
def _gat_transform_kernel(heads, c_out, x_ref, w_ref, amat_ref, h_ref, s_ref):
    h = jnp.dot(x_ref[...], w_ref[...], preferred_element_type=jnp.float32)  # [T, H*C]
    s_ref[...] = jnp.dot(h, amat_ref[...], preferred_element_type=jnp.float32)  # [T, 2H]
    # Head-major repack via static lane slices.  This is the cheap O(N*F*W) stage; the
    # O(N^2) attention loop below never touches per-head lane slices.
    for hh in range(heads):
        h_ref[hh] = h[:, hh * c_out:(hh + 1) * c_out]


def gat_transform(x, w, amat, *, heads, c_out, tile_t):
    n, f_in = x.shape
    width = heads * c_out
    assert w.shape == (f_in, width)
    assert amat.shape == (width, 2 * heads)
    assert n % tile_t == 0
    kernel = functools.partial(_gat_transform_kernel, heads, c_out)
    return pl.pallas_call(
        kernel,
        out_shape=(
            jax.ShapeDtypeStruct((heads, n, c_out), jnp.float32),  # W.x, head-major
            jax.ShapeDtypeStruct((n, 2 * heads), jnp.float32),     # [a_src | a_dst] scores
        ),
        grid_spec=pltpu.PrefetchScalarGridSpec(
            num_scalar_prefetch=0,
            grid=(n // tile_t,),
            in_specs=[
                pl.BlockSpec((tile_t, f_in), lambda i: (i, 0)),       # node features tile
                pl.BlockSpec((f_in, width), lambda i: (0, 0)),        # W (resident)
                pl.BlockSpec((width, 2 * heads), lambda i: (0, 0)),   # packed a_src|a_dst
            ],
            out_specs=(
                pl.BlockSpec((heads, tile_t, c_out), lambda i: (0, i, 0)),
                pl.BlockSpec((tile_t, 2 * heads), lambda i: (i, 0)),
            ),
        ),
        compiler_params=pltpu.CompilerParams(dimension_semantics=("parallel",)),
    )(x, w, amat)


# --------------------------------------------------------------------------------------
# Stage B: masked-softmax attention + aggregation (+ fused ELU / log_softmax).
# Grid = (row tiles  [parallel], source-node chunks  [arbitrary, online softmax]).
# --------------------------------------------------------------------------------------
def _gat_attn_kernel(heads, c_out, width_pad, activation,
                     s_dst_ref, s_src_ref, adj_ref, h_ref, b_ref,
                     out_ref, m_sc, l_sc, acc_sc):
    k = pl.program_id(1)

    @pl.when(k == 0)
    def _():
        m_sc[...] = jnp.full(m_sc.shape, -jnp.inf, m_sc.dtype)
        l_sc[...] = jnp.zeros(l_sc.shape, l_sc.dtype)
        acc_sc[...] = jnp.zeros(acc_sc.shape, acc_sc.dtype)

    # e[h, i, j] = a_dst.(W x_i) + a_src.(W x_j); LeakyReLU BEFORE the mask (PyG order).
    s_dst = s_dst_ref[...][:, :, None]                              # [H, T, 1]
    s_src = s_src_ref[...][:, None, :]                              # [H, 1, K]
    e = s_dst + s_src                                               # [H, T, K]
    e = jnp.where(e > 0, e, LEAKY_SLOPE * e)
    # int8 0/1 adjacency mask (self-loops guarantee every row has >= 1 real entry).
    e = jnp.where((adj_ref[...] != 0)[None, :, :], e, NEG_BIG)

    # Online (flash-style) softmax over source chunks.
    m_new = jnp.maximum(m_sc[...], jnp.max(e, axis=-1, keepdims=True))   # [H, T, 1]
    alpha = jnp.exp(m_sc[...] - m_new)
    p = jnp.exp(e - m_new)                                               # [H, T, K]
    l_sc[...] = alpha * l_sc[...] + jnp.sum(p, axis=-1, keepdims=True)
    acc_sc[...] = alpha * acc_sc[...] + jnp.einsum(
        'htk,hkc->htc', p, h_ref[...], preferred_element_type=jnp.float32)
    m_sc[...] = m_new

    @pl.when(k == pl.num_programs(1) - 1)
    def _():
        out_h = acc_sc[...] / l_sc[...]                             # [H, T, C], exact norm
        parts = [out_h[hh] for hh in range(heads)]
        pad = width_pad - heads * c_out
        if pad > 0:
            parts.append(jnp.zeros((out_h.shape[1], pad), jnp.float32))
        out = parts[0] if len(parts) == 1 else jnp.concatenate(parts, axis=-1)
        out = out + b_ref[...]
        if activation == "elu":
            out = jnp.where(out > 0, out, jnp.exp(jnp.minimum(out, 0.0)) - 1.0)
        elif activation == "log_softmax":
            m = jnp.max(out, axis=-1, keepdims=True)
            z = out - m
            out = z - jnp.log(jnp.sum(jnp.exp(z), axis=-1, keepdims=True))
        out_ref[...] = out.astype(out_ref.dtype)


def gat_attention(s_dst, s_src, adj, h, bias, *, heads, c_out, width_pad,
                  tile_n, tile_k, activation, out_dtype):
    n = adj.shape[0]
    assert adj.shape == (n, n)
    assert s_dst.shape == (heads, n) and s_src.shape == (heads, n)
    assert h.shape == (heads, n, c_out)
    assert bias.shape == (1, width_pad)
    assert n % tile_n == 0 and n % tile_k == 0
    assert width_pad >= heads * c_out
    kernel = functools.partial(_gat_attn_kernel, heads, c_out, width_pad, activation)
    return pl.pallas_call(
        kernel,
        out_shape=jax.ShapeDtypeStruct((n, width_pad), out_dtype),
        grid_spec=pltpu.PrefetchScalarGridSpec(
            num_scalar_prefetch=0,
            grid=(n // tile_n, n // tile_k),
            in_specs=[
                pl.BlockSpec((heads, tile_n), lambda i, k: (0, i)),          # dst scores
                pl.BlockSpec((heads, tile_k), lambda i, k: (0, k)),          # src scores
                pl.BlockSpec((tile_n, tile_k), lambda i, k: (i, k)),         # int8 adj block
                pl.BlockSpec((heads, tile_k, c_out), lambda i, k: (0, k, 0)),  # W.x chunk
                pl.BlockSpec((1, width_pad), lambda i, k: (0, 0)),           # bias
            ],
            out_specs=pl.BlockSpec((tile_n, width_pad), lambda i, k: (i, 0)),
            scratch_shapes=[
                pltpu.VMEM((heads, tile_n, 1), jnp.float32),       # running max
                pltpu.VMEM((heads, tile_n, 1), jnp.float32),       # running sum
                pltpu.VMEM((heads, tile_n, c_out), jnp.float32),   # running accumulator
            ],
        ),
        compiler_params=pltpu.CompilerParams(
            dimension_semantics=("parallel", "arbitrary"),
            vmem_limit_bytes=48 * 1024 * 1024,
        ),
    )(s_dst, s_src, adj, h, bias)


# --------------------------------------------------------------------------------------
# Full 2-layer GAT forward.
# --------------------------------------------------------------------------------------
def gat_forward(x, adj, params, *, heads, hidden, out_c, width1_pad, out_pad,
                tile_n, tile_k, tile_t):
    w1, amat1, b1p, w2p, amat2, b2p = params

    # Layer 1: multi-head, concat, fused ELU.
    h1, s1 = gat_transform(x, w1, amat1, heads=heads, c_out=hidden, tile_t=tile_t)
    s_src1 = jnp.transpose(s1[:, :heads])        # [H, N]  (tiny, done once in XLA)
    s_dst1 = jnp.transpose(s1[:, heads:])        # [H, N]
    x1 = gat_attention(s_dst1, s_src1, adj, h1, b1p,
                       heads=heads, c_out=hidden, width_pad=width1_pad,
                       tile_n=tile_n, tile_k=tile_k,
                       activation="elu", out_dtype=jnp.float32)

    # Layer 2: single head (lane-padded to out_pad), fused log_softmax.
    h2, s2 = gat_transform(x1, w2p, amat2, heads=1, c_out=out_pad, tile_t=tile_t)
    s_src2 = jnp.transpose(s2[:, :1])
    s_dst2 = jnp.transpose(s2[:, 1:])
    out_padded = gat_attention(s_dst2, s_src2, adj, h2, b2p,
                               heads=1, c_out=out_pad, width_pad=out_pad,
                               tile_n=tile_n, tile_k=tile_k,
                               activation="log_softmax", out_dtype=jnp.float32)
    return out_padded[:, :out_c]


# --------------------------------------------------------------------------------------
# Host-side preprocessing, parameters, and a pure-JAX reference.
# --------------------------------------------------------------------------------------
def build_adj(edge_index, n):
    """int8 0/1 mask: 1 where edge j->i exists (self-loops added), 0 elsewhere."""
    # TODO(synk): sparse edge_index is densified here; block-sparse chunk skipping via
    # scalar prefetch would avoid the O(N^2) mask for very sparse graphs.
    src, dst = edge_index[0], edge_index[1]
    adj = jnp.zeros((n, n), jnp.int8)
    adj = adj.at[dst, src].set(1)
    diag = jnp.arange(n)
    adj = adj.at[diag, diag].set(1)
    return adj


def init_params(key, in_c, hidden, out_c, heads, *, width1_pad, out_pad):
    ks = jax.random.split(key, 6)

    def glorot(k, shape):
        scale = jnp.sqrt(2.0 / (shape[-2] + shape[-1]))
        return jax.random.normal(k, shape, jnp.float32) * scale

    width1 = heads * hidden
    # Layer 1: in_c -> hidden per head, `heads` heads, concat.
    w1 = glorot(ks[0], (in_c, width1))
    a_src1 = glorot(ks[1], (heads, hidden))
    a_dst1 = glorot(ks[2], (heads, hidden))
    amat1 = jnp.zeros((width1, 2 * heads), jnp.float32)
    for hh in range(heads):
        amat1 = amat1.at[hh * hidden:(hh + 1) * hidden, hh].set(a_src1[hh])
        amat1 = amat1.at[hh * hidden:(hh + 1) * hidden, heads + hh].set(a_dst1[hh])
    b1p = jnp.zeros((1, width1_pad), jnp.float32)   # real bias (zeros) + zero lane padding

    # Layer 2: width1 -> out_c, single head.  Rows padded to width1_pad (matching the
    # zero-padded layer-1 output), columns padded to out_pad for a lane-dense store;
    # -1e30 bias in padded columns makes the 128-wide log_softmax equal the real one.
    w2 = glorot(ks[3], (width1, out_c))
    a_src2 = glorot(ks[4], (1, out_c))[0]
    a_dst2 = glorot(ks[5], (1, out_c))[0]
    w2p = jnp.zeros((width1_pad, out_pad), jnp.float32).at[:width1, :out_c].set(w2)
    amat2 = jnp.zeros((out_pad, 2), jnp.float32)
    amat2 = amat2.at[:out_c, 0].set(a_src2)
    amat2 = amat2.at[:out_c, 1].set(a_dst2)
    b2p = jnp.full((1, out_pad), NEG_BIG, jnp.float32).at[0, :out_c].set(0.0)
    return (w1, amat1, b1p, w2p, amat2, b2p)


def gat_reference(x, adj, params, *, heads, hidden, out_c, width1_pad, out_pad):
    """Dense pure-JAX reference with identical semantics (for correctness check)."""
    w1, amat1, b1p, w2p, amat2, b2p = params
    mask = adj != 0

    def conv(xin, w, amat, n_heads, c):
        h = xin @ w
        s = h @ amat
        outs = []
        for hh in range(n_heads):
            e = s[:, n_heads + hh][:, None] + s[:, hh][None, :]
            e = jnp.where(e > 0, e, LEAKY_SLOPE * e)
            e = jnp.where(mask, e, NEG_BIG)
            p = jax.nn.softmax(e, axis=-1)
            outs.append(p @ h[:, hh * c:(hh + 1) * c])
        return jnp.concatenate(outs, axis=-1)

    width1 = heads * hidden
    y1 = conv(x, w1, amat1, heads, hidden) + b1p[:, :width1]
    y1 = jnp.where(y1 > 0, y1, jnp.exp(jnp.minimum(y1, 0.0)) - 1.0)
    y1p = jnp.zeros((x.shape[0], width1_pad), jnp.float32).at[:, :width1].set(y1)
    y2 = conv(y1p, w2p, amat2, 1, out_pad) + b2p
    y2 = jax.nn.log_softmax(y2, axis=-1)
    return y2[:, :out_c]


if __name__ == "__main__":
    N = 256          # graph nodes
    IN_C = 16        # in_channels
    HIDDEN = 16      # hidden_channels
    OUT_C = 8        # out_channels
    HEADS = 2        # heads for conv1
    E = 1024         # random edges
    TILE_N = 128     # target-node row tile (parallel axis; multiple of 32 for int8 adj)
    TILE_K = 128     # source-node chunk (online-softmax axis; multiple of 128 for int8 adj)
    TILE_T = 128     # transform-stage row tile
    WIDTH1_PAD = 128  # lane-dense padded width of layer-1 output
    OUT_PAD = 128     # lane-dense padded width of layer-2 output

    key = jax.random.PRNGKey(0)
    kx, ke, kp = jax.random.split(key, 3)

    x = jax.random.normal(kx, (N, IN_C), jnp.float32)
    edge_index = jax.random.randint(ke, (2, E), 0, N, jnp.int32)
    adj = build_adj(edge_index, N)
    params = init_params(kp, IN_C, HIDDEN, OUT_C, HEADS,
                         width1_pad=WIDTH1_PAD, out_pad=OUT_PAD)

    out = gat_forward(x, adj, params, heads=HEADS, hidden=HIDDEN, out_c=OUT_C,
                      width1_pad=WIDTH1_PAD, out_pad=OUT_PAD,
                      tile_n=TILE_N, tile_k=TILE_K, tile_t=TILE_T)
    out = jax.block_until_ready(out)

    assert out.shape == (N, OUT_C)
    assert bool(jnp.all(jnp.isfinite(out)))
    # rows of log_softmax should exp-sum to ~1
    assert bool(jnp.allclose(jnp.sum(jnp.exp(out), axis=-1), 1.0, atol=1e-3))
    # match the dense pure-JAX reference
    ref = gat_reference(x, adj, params, heads=HEADS, hidden=HIDDEN, out_c=OUT_C,
                        width1_pad=WIDTH1_PAD, out_pad=OUT_PAD)
    assert bool(jnp.allclose(out, ref, atol=2e-3, rtol=2e-3))
    print("KERNEL_OK")
</pallas_src>

<mosaic_0001>
module attributes {stable_mosaic.version = 11 : i64} {
  func.func @_gat_transform_kernel(%arg0: i32, %arg1: memref<128x16xf32, #tpu.memory_space<vmem>>, %arg2: memref<16x32xf32, #tpu.memory_space<vmem>>, %arg3: memref<32x4xf32, #tpu.memory_space<vmem>>, %arg4: memref<2x128x16xf32, #tpu.memory_space<vmem>>, %arg5: memref<128x4xf32, #tpu.memory_space<vmem>>) attributes {dimension_semantics = [#tpu.dimension_semantics<parallel>], iteration_bounds = array<i64: 2>, scalar_prefetch = 0 : i64, scratch_operands = 0 : i64, tpu.core_type = #tpu.core_type<tc>, window_params = [{transform_indices = @transform_0, window_bounds = array<i64: 128, 16>}, {pipeline_mode = #tpu.pipeline_mode<synchronous>, transform_indices = @transform_1, window_bounds = array<i64: 16, 32>}, {pipeline_mode = #tpu.pipeline_mode<synchronous>, transform_indices = @transform_2, window_bounds = array<i64: 32, 4>}, {transform_indices = @transform_3, window_bounds = array<i64: 2, 128, 16>}, {transform_indices = @transform_4, window_bounds = array<i64: 128, 4>}]} {
    %c0 = arith.constant 0 : index
    %c0_0 = arith.constant 0 : index
    %0 = vector.load %arg1[%c0, %c0_0] : memref<128x16xf32, #tpu.memory_space<vmem>>, vector<128x16xf32>
    %c0_1 = arith.constant 0 : index
    %c0_2 = arith.constant 0 : index
    %1 = vector.load %arg2[%c0_1, %c0_2] : memref<16x32xf32, #tpu.memory_space<vmem>>, vector<16x32xf32>
    %cst = arith.constant dense<0.000000e+00> : vector<128x32xf32>
    %2 = tpu.matmul %0, %1, %cst {dimension_numbers = #tpu.dot_dimension_numbers<[1], [0], [0], [1], [0, 0, 1, 1], [], []>} : vector<128x16xf32>, vector<16x32xf32>, vector<128x32xf32> -> vector<128x32xf32>
    %c0_3 = arith.constant 0 : index
    %c0_4 = arith.constant 0 : index
    %3 = vector.load %arg3[%c0_3, %c0_4] : memref<32x4xf32, #tpu.memory_space<vmem>>, vector<32x4xf32>
    %cst_5 = arith.constant dense<0.000000e+00> : vector<128x4xf32>
    %4 = tpu.matmul %2, %3, %cst_5 {dimension_numbers = #tpu.dot_dimension_numbers<[1], [0], [0], [1], [0, 0, 1, 1], [], []>} : vector<128x32xf32>, vector<32x4xf32>, vector<128x4xf32> -> vector<128x4xf32>
    %c0_6 = arith.constant 0 : index
    %c0_7 = arith.constant 0 : index
    %5 = vector.load %arg5[%c0_6, %c0_7] : memref<128x4xf32, #tpu.memory_space<vmem>>, vector<128x4xf32>
    tpu.vector_store %arg5[%c0_6, %c0_7], %4 {strides = array<i32>} : memref<128x4xf32, #tpu.memory_space<vmem>>, vector<128x4xf32>,
    %6 = vector.extract_strided_slice %2 {offsets = [0, 0], sizes = [128, 16], strides = [1, 1]} : vector<128x32xf32> to vector<128x16xf32>
    %c0_8 = arith.constant 0 : index
    %c0_9 = arith.constant 0 : index
    %c0_10 = arith.constant 0 : index
    %7 = vector.load %arg4[%c0_8, %c0_9, %c0_10] : memref<2x128x16xf32, #tpu.memory_space<vmem>>, vector<1x128x16xf32>
    %8 = vector.shape_cast %7 : vector<1x128x16xf32> to vector<128x16xf32>
    %9 = vector.shape_cast %6 : vector<128x16xf32> to vector<1x128x16xf32>
    tpu.vector_store %arg4[%c0_8, %c0_9, %c0_10], %9 {strides = array<i32>} : memref<2x128x16xf32, #tpu.memory_space<vmem>>, vector<1x128x16xf32>,
    %10 = vector.extract_strided_slice %2 {offsets = [0, 16], sizes = [128, 16], strides = [1, 1]} : vector<128x32xf32> to vector<128x16xf32>
    %c1 = arith.constant 1 : index
    %c0_11 = arith.constant 0 : index
    %c0_12 = arith.constant 0 : index
    %11 = vector.load %arg4[%c1, %c0_11, %c0_12] : memref<2x128x16xf32, #tpu.memory_space<vmem>>, vector<1x128x16xf32>
    %12 = vector.shape_cast %11 : vector<1x128x16xf32> to vector<128x16xf32>
    %13 = vector.shape_cast %10 : vector<128x16xf32> to vector<1x128x16xf32>
    tpu.vector_store %arg4[%c1, %c0_11, %c0_12], %13 {strides = array<i32>} : memref<2x128x16xf32, #tpu.memory_space<vmem>>, vector<1x128x16xf32>,
    return
  }
  func.func @transform_0(%arg0: i32) -> (i32, i32) {
    %c0_i32 = arith.constant 0 : i32
    %c0_i32_0 = arith.constant 0 : i32
    return %arg0, %c0_i32 : i32, i32
  }
  func.func @transform_1(%arg0: i32) -> (i32, i32) {
    %c0_i32 = arith.constant 0 : i32
    %c0_i32_0 = arith.constant 0 : i32
    %c0_i32_1 = arith.constant 0 : i32
    return %c0_i32, %c0_i32_0 : i32, i32
  }
  func.func @transform_2(%arg0: i32) -> (i32, i32) {
    %c0_i32 = arith.constant 0 : i32
    %c0_i32_0 = arith.constant 0 : i32
    %c0_i32_1 = arith.constant 0 : i32
    return %c0_i32, %c0_i32_0 : i32, i32
  }
  func.func @transform_3(%arg0: i32) -> (i32, i32, i32) {
    %c0_i32 = arith.constant 0 : i32
    %c0_i32_0 = arith.constant 0 : i32
    %c0_i32_1 = arith.constant 0 : i32
    return %c0_i32, %arg0, %c0_i32_0 : i32, i32, i32
  }
  func.func @transform_4(%arg0: i32) -> (i32, i32) {
    %c0_i32 = arith.constant 0 : i32
    %c0_i32_0 = arith.constant 0 : i32
    return %arg0, %c0_i32 : i32, i32
  }
}

</mosaic_0001>

<llo_original>
// kernel: tpu_custom_call.1
$region0: #{tpu_custom_call.1}
  #allocation0 [shape = 'u32[]', space=smem, size = 0x4, offset = 0x4, fixed_abs, tag = 'smem constant byte address 0x4 - core index']
  #allocation1 [shape = 'u32[144,128]{1,0:T(1,128)}', space=vmem, size = 0x12000, scoped, tag = 'internal scratch']
  %s0 = inlined_call_operand.vmem [shape: f32[256,16], index: 0, kind: input, shape index: {}]
  %s1 = inlined_call_operand.vmem [shape: f32[16,32], index: 1, kind: input, shape index: {}]
  %s2 = inlined_call_operand.vmem [shape: f32[32,4], index: 2, kind: input, shape index: {}]
  %s3 = inlined_call_operand.vmem [shape: f32[2,256,16], index: 3, kind: output, shape index: {0}]
  %s4 = inlined_call_operand.vmem [shape: f32[256,4], index: 4, kind: output, shape index: {1}]
  %5 = xla_tuple %s3, %s4
  %s6 = sld [smem:[#allocation0]]
  $region87: #{tpu_custom_call.1} parent=0
    _
  %s8 = ssub.s32 1, %s6
  %s9 = scalar_select 0, %s8, %s6
  $region1: #{tpu_custom_call.1} parent=0
    #allocation2 [shape = 'u8[262144]{0}', space=vmem, size = 0x40000, scoped, tag = 'output window, operand 0']
    loop: start=0, step=1, limit=4
    $region2: #{tpu_custom_call.1} parent=1 // loop_pre_header
      _
    $region3: #{tpu_custom_call.1} parent=1 // loop_header
      %s11 = sphi 0, %s15
      %p12 = scmp.ge.s32.totalorder %s11, 4
      %s21 = sphi 0, %s23
      %s24 = sphi 0, %s21
      %s25 = sphi 0, %s24
      %s41 = sphi 0, %s25
      %s45 = sphi 0, %s45
      %s47 = sphi 0, %s45
      %s48 = sphi 0, %s47
      %s62 = sphi 0, %s48
      %s66 = sphi 0, %s66
      %s68 = sphi 0, %s66
      %s69 = sphi 0, %s68
      %s83 = sphi 0, %s69
      %s89 = sphi 0, %s91
      %s92 = sphi 0, %s89
      %s93 = sphi 0, %s92
      %s109 = sphi 0, %s93
      %s115 = sphi 0, %s117
      %s118 = sphi 0, %s115
      %s119 = sphi 0, %s118
      %s135 = sphi 0, %s119
    $region4: #{tpu_custom_call.1} parent=1 // loop_header_branch
      %14 = sbr.rel (%p12) target = $region8
    $region5: #{tpu_custom_call.1} parent=1 // loop_body
      %s16 = ssub.s32 %s11, 1
      %s17 = ssub.s32 %s11, 2
      %s18 = sadd.s32 %s11, 1
      %s19 = ssub.s32 %s11, %s18
      %p20 = scmp.eq.s32.totalorder %s19, 0
      %s22 = sadd.s32 %s21, 1
      %s23 = scalar_select %p20, %s21, %s22
      %p26 = pneg %p20
      %p27 = scmp.eq.s32.totalorder %s11, 1
      %p28 = por %p26, %p27
      %p29 = scmp.ne.s32.totalorder %s21, %s24
      %p30 = scmp.eq.s32.totalorder %s11, 0
      %p31 = por %p29, %p30
      %p32 = scmp.ne.s32.totalorder %s21, %s24
      %p33 = scmp.eq.s32.totalorder %s16, 1
      %p34 = por %p32, %p33
      %p35 = scmp.ne.s32.totalorder %s24, %s25
      %p36 = scmp.eq.s32.totalorder %s16, 0
      %p37 = por %p35, %p36
      %p38 = scmp.ne.s32.totalorder %s24, %s25
      %p39 = scmp.eq.s32.totalorder %s17, 1
      %p40 = por %p38, %p39
      %p42 = scmp.ne.s32.totalorder %s25, %s41
      %p43 = scmp.eq.s32.totalorder %s17, 0
      %p44 = por %p42, %p43
      %s46 = sadd.s32 %s45, 1
      %p49 = scmp.eq.s32.totalorder %s11, 1
      %p50 = scmp.ne.s32.totalorder %s45, %s47
      %p51 = scmp.eq.s32.totalorder %s11, 0
      %p52 = por %p50, %p51
      %p53 = scmp.ne.s32.totalorder %s45, %s47
      %p54 = scmp.eq.s32.totalorder %s16, 1
      %p55 = por %p53, %p54
      %p56 = scmp.ne.s32.totalorder %s47, %s48
      %p57 = scmp.eq.s32.totalorder %s16, 0
      %p58 = por %p56, %p57
      %p59 = scmp.ne.s32.totalorder %s47, %s48
      %p60 = scmp.eq.s32.totalorder %s17, 1
      %p61 = por %p59, %p60
      %p63 = scmp.ne.s32.totalorder %s48, %s62
      %p64 = scmp.eq.s32.totalorder %s17, 0
      %p65 = por %p63, %p64
      %s67 = sadd.s32 %s66, 1
      %p70 = scmp.eq.s32.totalorder %s11, 1
      %p71 = scmp.ne.s32.totalorder %s66, %s68
      %p72 = scmp.eq.s32.totalorder %s11, 0
      %p73 = por %p71, %p72
      %p74 = scmp.ne.s32.totalorder %s66, %s68
      %p75 = scmp.eq.s32.totalorder %s16, 1
      %p76 = por %p74, %p75
      %p77 = scmp.ne.s32.totalorder %s68, %s69
      %p78 = scmp.eq.s32.totalorder %s16, 0
      %p79 = por %p77, %p78
      %p80 = scmp.ne.s32.totalorder %s68, %s69
      %p81 = scmp.eq.s32.totalorder %s17, 1
      %p82 = por %p80, %p81
      %p84 = scmp.ne.s32.totalorder %s69, %s83
      %p85 = scmp.eq.s32.totalorder %s17, 0
      %p86 = por %p84, %p85
      %s87 = ssub.s32 %s11, %s18
      %p88 = scmp.eq.s32.totalorder %s87, 0
      %s90 = sadd.s32 %s89, 1
      %s91 = scalar_select %p88, %s89, %s90
      %p94 = pneg %p88
      %p95 = scmp.eq.s32.totalorder %s11, 1
      %p96 = por %p94, %p95
      %p97 = scmp.ne.s32.totalorder %s89, %s92
      %p98 = scmp.eq.s32.totalorder %s11, 0
      %p99 = por %p97, %p98
      %p100 = scmp.ne.s32.totalorder %s89, %s92
      %p101 = scmp.eq.s32.totalorder %s16, 1
      %p102 = por %p100, %p101
      %p103 = scmp.ne.s32.totalorder %s92, %s93
      %p104 = scmp.eq.s32.totalorder %s16, 0
      %p105 = por %p103, %p104
      %p106 = scmp.ne.s32.totalorder %s92, %s93
      %p107 = scmp.eq.s32.totalorder %s17, 1
      %p108 = por %p106, %p107
      %p110 = scmp.ne.s32.totalorder %s93, %s109
      %p111 = scmp.eq.s32.totalorder %s17, 0
      %p112 = por %p110, %p111
      %s113 = ssub.s32 %s11, %s18
      %p114 = scmp.eq.s32.totalorder %s113, 0
      %s116 = sadd.s32 %s115, 1
      %s117 = scalar_select %p114, %s115, %s116
      %p120 = pneg %p114
      %p121 = scmp.eq.s32.totalorder %s11, 1
      %p122 = por %p120, %p121
      %p123 = scmp.ne.s32.totalorder %s115, %s118
      %p124 = scmp.eq.s32.totalorder %s11, 0
      %p125 = por %p123, %p124
      %p126 = scmp.ne.s32.totalorder %s115, %s118
      %p127 = scmp.eq.s32.totalorder %s16, 1
      %p128 = por %p126, %p127
      %p129 = scmp.ne.s32.totalorder %s118, %s119
      %p130 = scmp.eq.s32.totalorder %s16, 0
      %p131 = por %p129, %p130
      %p132 = scmp.ne.s32.totalorder %s118, %s119
      %p133 = scmp.eq.s32.totalorder %s17, 1
      %p134 = por %p132, %p133
      %p136 = scmp.ne.s32.totalorder %s119, %s135
      %p137 = scmp.eq.s32.totalorder %s17, 0
      %p138 = por %p136, %p137
      %p139 = scmp.le.s32.totalorder 1, %s11
      %p140 = scmp.lt.s32.totalorder %s11, 3
      %p141 = pnand %p139, %p140
      %p142 = pneg %p141
      // Predicated region
      $region9: #{tpu_custom_call.1} parent=5 // pred_check
        _
      $region10: #{tpu_custom_call.1} parent=5 // pred_check_branch
        %144 = sbr.rel (%p141) target = $region12
      $region11: #{tpu_custom_call.1} parent=5 // pred_region
        %s145 = ssub.s32 %s11, 1
        // Predicated region
        $region13: #{tpu_custom_call.1} parent=11 // pred_check
          %p146 = pneg %p58
        $region14: #{tpu_custom_call.1} parent=11 // pred_check_branch
          %148 = sbr.rel (%p146) target = $region16
        $region15: #{tpu_custom_call.1} parent=11 // pred_region
          _
        $region16: #{tpu_custom_call.1} parent=11 // pred_fallthru
          _
        // Predicated region
        $region17: #{tpu_custom_call.1} parent=11 // pred_check
          %p149 = pneg %p79
        $region18: #{tpu_custom_call.1} parent=11 // pred_check_branch
          %151 = sbr.rel (%p149) target = $region20
        $region19: #{tpu_custom_call.1} parent=11 // pred_region
          _
        $region20: #{tpu_custom_call.1} parent=11 // pred_fallthru
          _
      $region12: #{tpu_custom_call.1} parent=5 // pred_fallthru
        _
      %p152 = scmp.lt.s32.totalorder %s11, 2
      // Predicated region
      $region21: #{tpu_custom_call.1} parent=5 // pred_check
        %p153 = pneg %p152
      $region22: #{tpu_custom_call.1} parent=5 // pred_check_branch
        %155 = sbr.rel (%p153) target = $region24
      $region23: #{tpu_custom_call.1} parent=5 // pred_region
        // Predicated region
        $region25: #{tpu_custom_call.1} parent=23 // pred_check
          %p156 = pneg %p31
        $region26: #{tpu_custom_call.1} parent=23 // pred_check_branch
          %158 = sbr.rel (%p156) target = $region28
        $region27: #{tpu_custom_call.1} parent=23 // pred_region
          %s159 = smul.u32 16, %s11
          %p160 = scmp.lt.s32.totalorder %s159, 31
          %s161 = scalar_select %p160, %s159, 31
          %s162 = smul.addr %s161, 8
          %s163 = scalar_lea.vmem %s0, %s162
          %s164 = smul.u32 16, %s11
        $region28: #{tpu_custom_call.1} parent=23 // pred_fallthru
          _
      $region24: #{tpu_custom_call.1} parent=5 // pred_fallthru
        _
      %p165 = scmp.le.s32.totalorder 1, %s11
      %p166 = scmp.lt.s32.totalorder %s11, 3
      %p167 = pnand %p165, %p166
      %p168 = pneg %p167
      // Predicated region
      $region29: #{tpu_custom_call.1} parent=5 // pred_check
        _
      $region30: #{tpu_custom_call.1} parent=5 // pred_check_branch
        %170 = sbr.rel (%p167) target = $region32
      $region31: #{tpu_custom_call.1} parent=5 // pred_region
        %s171 = ssub.s32 %s11, 1
        %s172 = smul.u32 16, %s16
        %p173 = scmp.lt.s32.totalorder %s172, 31
        %s174 = scalar_select %p173, %s172, 31
        %s175 = smul.addr %s174, 8
        %s176 = scalar_lea.vmem %s0, %s175
        %p177 = pneg %p37
        %p178 = pneg %p34
        %p179 = pneg %p58
        %p180 = pneg %p55
        %p181 = pneg %p79
        %p182 = pneg %p76
        %p183 = pneg %p105
        %p184 = pneg %p102
        %s185 = sand.u32 %s92, 1
        %s186 = sand.u32 %s92, 1
        %s187 = smul.addr %s186, 256
        %s188 = scalar_lea.vmem [#allocation2], %s187
        %p189 = pneg %p131
        %p190 = pneg %p128
        %s191 = smul.u32 16, %s16
        %p192 = scmp.lt.s32.totalorder %s191, 31
        %s193 = scalar_select %p192, %s191, 31
        %s194 = smul.addr %s193, 8
        %s195 = scalar_lea.vmem %s4, %s194
        %s196 = smul.u32 16, %s16
        %p197 = scmp.lt.s32.totalorder %s196, 31
        %s198 = scalar_select %p197, %s196, 31
        %s199 = smul.addr %s198, 8
        %s200 = scalar_lea.vmem %s0, %s199
        %s201 = smul.u32 16, %s16
        %s202 = smul.u32 16, %s16
        %s203 = smul.u32 16, %s16
        %p204 = scmp.lt.s32.totalorder %s203, 31
        %s205 = scalar_select %p204, %s203, 31
        %s206 = smul.addr %s205, 8
        %s207 = scalar_lea.vmem %s4, %s206
        %s208 = smul.u32 16, %s16
        %v209 = vld [vmem:[%s200] sm:$0xff]
        %v210 = vld [vmem:[%s200 + $0x8] sm:$0xff]
        %v211 = vld [vmem:[%s200 + $0x10] sm:$0xff]
        %v212 = vld [vmem:[%s200 + $0x18] sm:$0xff]
        %v213 = vld [vmem:[%s200 + $0x20] sm:$0xff]
        %v214 = vld [vmem:[%s200 + $0x28] sm:$0xff]
        %v215 = vld [vmem:[%s200 + $0x30] sm:$0xff]
        %v216 = vld [vmem:[%s200 + $0x38] sm:$0xff]
        %v217 = vld [vmem:[%s200 + $0x40] sm:$0xff]
        %v218 = vld [vmem:[%s200 + $0x48] sm:$0xff]
        %v219 = vld [vmem:[%s200 + $0x50] sm:$0xff]
        %v220 = vld [vmem:[%s200 + $0x58] sm:$0xff]
        %v221 = vld [vmem:[%s200 + $0x60] sm:$0xff]
        %v222 = vld [vmem:[%s200 + $0x68] sm:$0xff]
        %v223 = vld [vmem:[%s200 + $0x70] sm:$0xff]
        %v224 = vld [vmem:[%s200 + $0x78] sm:$0xff]
        %v225 = vld [vmem:[%s1] sm:$0xff]
        %v226 = vld [vmem:[%s1 + $0x8] sm:$0xff]
        %vm227 = vcmask 130048
        %v229 = vsel %vm227, %v209, 0
        %v232 = vsel %vm227, %v210, 0
        %v235 = vsel %vm227, %v211, 0
        %v238 = vsel %vm227, %v212, 0
        %v241 = vsel %vm227, %v213, 0
        %v244 = vsel %vm227, %v214, 0
        %v247 = vsel %vm227, %v215, 0
        %v250 = vsel %vm227, %v216, 0
        %v253 = vsel %vm227, %v217, 0
        %v256 = vsel %vm227, %v218, 0
        %v259 = vsel %vm227, %v219, 0
        %v262 = vsel %vm227, %v220, 0
        %v265 = vsel %vm227, %v221, 0
        %v268 = vsel %vm227, %v222, 0
        %v271 = vsel %vm227, %v223, 0
        %v274 = vsel %vm227, %v224, 0
        %276 = vmatprep.subr.mxu0 0.0
        %277 = vmatpush1.msra.mxu0 0.0
        %278 = vmatprep.subr.mxu0 0.0
        %279 = vmatpush1.msra.mxu0 0.0
        %280 = vmatprep.subr.mxu0 0.0
        %281 = vmatpush1.msra.mxu0 0.0
        %282 = vmatprep.subr.mxu0 0.0
        %283 = vmatpush1.msra.mxu0 0.0
        %284 = vmatprep.subr.mxu0 0.0
        %285 = vmatpush1.msra.mxu0 0.0
        %286 = vmatprep.subr.mxu0 0.0
        %287 = vmatpush1.msra.mxu0 0.0
        %288 = vmatprep.subr.mxu0 0.0
        %289 = vmatpush1.msra.mxu0 0.0
        %290 = vmatprep.subr.mxu0 0.0
        %291 = vmatpush1.msra.mxu0 0.0
        %292 = vmatprep.subr.mxu0 0.0
        %293 = vmatpush1.msra.mxu0 0.0
        %294 = vmatprep.subr.mxu0 0.0
        %295 = vmatpush1.msra.mxu0 0.0
        %296 = vmatprep.subr.mxu0 0.0
        %297 = vmatpush1.msra.mxu0 0.0
        %298 = vmatprep.subr.mxu0 0.0
        %299 = vmatpush1.msra.mxu0 0.0
        %300 = vmatprep.subr.mxu0 0.0
        %301 = vmatpush1.msra.mxu0 0.0
        %302 = vmatprep.subr.mxu0 0.0
        %303 = vmatpush1.msra.mxu0 0.0
        %304 = vmatprep.subr.mxu0 0.0
        %305 = vmatpush1.msra.mxu0 %v226
        %306 = vmatprep.subr.mxu0 0.0
        %307 = vmatpush1.msra.mxu0 %v225
        %308 = vmatprep.subr.mxu0 0.0
        %309 = vmatpush2.msra.mxu0 0.0
        %310 = vmatprep.subr.mxu0 0.0
        %311 = vmatpush2.msra.mxu0 0.0
        %312 = vmatprep.subr.mxu0 0.0
        %313 = vmatpush2.msra.mxu0 0.0
        %314 = vmatprep.subr.mxu0 0.0
        %315 = vmatpush2.msra.mxu0 0.0
        %316 = vmatprep.subr.mxu0 0.0
        %317 = vmatpush2.msra.mxu0 0.0
        %318 = vmatprep.subr.mxu0 0.0
        %319 = vmatpush2.msra.mxu0 0.0
        %320 = vmatprep.subr.mxu0 0.0
        %321 = vmatpush2.msra.mxu0 0.0
        %322 = vmatprep.subr.mxu0 0.0
        %323 = vmatpush2.msra.mxu0 0.0
        %324 = vmatprep.subr.mxu0 0.0
        %325 = vmatpush2.msra.mxu0 0.0
        %326 = vmatprep.subr.mxu0 0.0
        %327 = vmatpush2.msra.mxu0 0.0
        %328 = vmatprep.subr.mxu0 0.0
        %329 = vmatpush2.msra.mxu0 0.0
        %330 = vmatprep.subr.mxu0 0.0
        %331 = vmatpush2.msra.mxu0 0.0
        %332 = vmatprep.subr.mxu0 0.0
        %333 = vmatpush2.msra.mxu0 0.0
        %334 = vmatprep.subr.mxu0 0.0
        %335 = vmatpush2.msra.mxu0 0.0
        %336 = vmatprep.subr.mxu0 0.0
        %337 = vmatpush2.msra.mxu0 0.0
        %338 = vmatprep.subr.mxu0 0.0
        %339 = vmatpush2.msra.mxu0 0.0
        %340 = vmatprep.mubr.f32.mxu0 0.0
        %341 = vmatmul.mubr.f32.gmra.mxu0 %v229
        %v342 = vpop.f32.mrf.mxu0
        %v343 = vadd.f32 0.0, %v342
        %v344 = vpop.f32.mrf.mxu0
        %345 = vmatprep.mubr.f32.mxu0 0.0
        %346 = vmatmul.mubr.f32.gmra.mxu0 %v232
        %v347 = vpop.f32.mrf.mxu0
        %v348 = vadd.f32 0.0, %v347
        %v349 = vpop.f32.mrf.mxu0
        %350 = vmatprep.mubr.f32.mxu0 0.0
        %351 = vmatmul.mubr.f32.gmra.mxu0 %v235
        %v352 = vpop.f32.mrf.mxu0
        %v353 = vadd.f32 0.0, %v352
        %v354 = vpop.f32.mrf.mxu0
        %355 = vmatprep.mubr.f32.mxu0 0.0
        %356 = vmatmul.mubr.f32.gmra.mxu0 %v238
        %v357 = vpop.f32.mrf.mxu0
        %v358 = vadd.f32 0.0, %v357
        %v359 = vpop.f32.mrf.mxu0
        %360 = vmatprep.mubr.f32.mxu0 0.0
        %361 = vmatmul.mubr.f32.gmra.mxu0 %v241
        %v362 = vpop.f32.mrf.mxu0
        %v363 = vadd.f32 0.0, %v362
        %v364 = vpop.f32.mrf.mxu0
        %365 = vmatprep.mubr.f32.mxu0 0.0
        %366 = vmatmul.mubr.f32.gmra.mxu0 %v244
        %v367 = vpop.f32.mrf.mxu0
        %v368 = vadd.f32 0.0, %v367
        %v369 = vpop.f32.mrf.mxu0
        %370 = vmatprep.mubr.f32.mxu0 0.0
        %371 = vmatmul.mubr.f32.gmra.mxu0 %v247
        %v372 = vpop.f32.mrf.mxu0
        %v373 = vadd.f32 0.0, %v372
        %v374 = vpop.f32.mrf.mxu0
        %375 = vmatprep.mubr.f32.mxu0 0.0
        %376 = vmatmul.mubr.f32.gmra.mxu0 %v250
        %v377 = vpop.f32.mrf.mxu0
        %v378 = vadd.f32 0.0, %v377
        %v379 = vpop.f32.mrf.mxu0
        %380 = vmatprep.mubr.f32.mxu0 0.0
        %381 = vmatmul.mubr.f32.gmra.mxu0 %v253
        %v382 = vpop.f32.mrf.mxu0
        %v383 = vadd.f32 0.0, %v382
        %v384 = vpop.f32.mrf.mxu0
        %385 = vmatprep.mubr.f32.mxu0 0.0
        %386 = vmatmul.mubr.f32.gmra.mxu0 %v256
        %v387 = vpop.f32.mrf.mxu0
        %v388 = vadd.f32 0.0, %v387
        %v389 = vpop.f32.mrf.mxu0
        %390 = vmatprep.mubr.f32.mxu0 0.0
        %391 = vmatmul.mubr.f32.gmra.mxu0 %v259
        %v392 = vpop.f32.mrf.mxu0
        %v393 = vadd.f32 0.0, %v392
        %v394 = vpop.f32.mrf.mxu0
        %395 = vmatprep.mubr.f32.mxu0 0.0
        %396 = vmatmul.mubr.f32.gmra.mxu0 %v262
        %v397 = vpop.f32.mrf.mxu0
        %v398 = vadd.f32 0.0, %v397
        %v399 = vpop.f32.mrf.mxu0
        %400 = vmatprep.mubr.f32.mxu0 0.0
        %401 = vmatmul.mubr.f32.gmra.mxu0 %v265
        %v402 = vpop.f32.mrf.mxu0
        %v403 = vadd.f32 0.0, %v402
        %v404 = vpop.f32.mrf.mxu0
        %405 = vmatprep.mubr.f32.mxu0 0.0
        %406 = vmatmul.mubr.f32.gmra.mxu0 %v268
        %v407 = vpop.f32.mrf.mxu0
        %v408 = vadd.f32 0.0, %v407
        %v409 = vpop.f32.mrf.mxu0
        %410 = vmatprep.mubr.f32.mxu0 0.0
        %411 = vmatmul.mubr.f32.gmra.mxu0 %v271
        %v412 = vpop.f32.mrf.mxu0
        %v413 = vadd.f32 0.0, %v412
        %v414 = vpop.f32.mrf.mxu0
        %415 = vmatprep.mubr.f32.mxu0 0.0
        %416 = vmatmul.mubr.f32.gmra.mxu0 %v274
        %v417 = vpop.f32.mrf.mxu0
        %v418 = vadd.f32 0.0, %v417
        %v419 = vpop.f32.mrf.mxu0
        %420 = vdwg.mxu0
        %v421 = vld [vmem:[%s2] sm:$0xff]
        %v422 = vld [vmem:[%s2 + $0x8] sm:$0xff]
        %v423 = vld [vmem:[%s2 + $0x10] sm:$0xff]
        %v424 = vld [vmem:[%s2 + $0x18] sm:$0xff]
        %vm425 = vcmask 261120
        %v427 = vsel %vm425, %v343, 0
        %v430 = vsel %vm425, %v348, 0
        %v433 = vsel %vm425, %v353, 0
        %v436 = vsel %vm425, %v358, 0
        %v439 = vsel %vm425, %v363, 0
        %v442 = vsel %vm425, %v368, 0
        %v445 = vsel %vm425, %v373, 0
        %v448 = vsel %vm425, %v378, 0
        %v451 = vsel %vm425, %v383, 0
        %v454 = vsel %vm425, %v388, 0
        %v457 = vsel %vm425, %v393, 0
        %v460 = vsel %vm425, %v398, 0
        %v463 = vsel %vm425, %v403, 0
        %v466 = vsel %vm425, %v408, 0
        %v469 = vsel %vm425, %v413, 0
        %v472 = vsel %vm425, %v418, 0
        %474 = vmatprep.subr.mxu0 0.0
        %475 = vmatpush1.msra.mxu0 0.0
        %476 = vmatprep.subr.mxu0 0.0
        %477 = vmatpush1.msra.mxu0 0.0
        %478 = vmatprep.subr.mxu0 0.0
        %479 = vmatpush1.msra.mxu0 0.0
        %480 = vmatprep.subr.mxu0 0.0
        %481 = vmatpush1.msra.mxu0 0.0
        %482 = vmatprep.subr.mxu0 0.0
        %483 = vmatpush1.msra.mxu0 0.0
        %484 = vmatprep.subr.mxu0 0.0
        %485 = vmatpush1.msra.mxu0 0.0
        %486 = vmatprep.subr.mxu0 0.0
        %487 = vmatpush1.msra.mxu0 0.0
        %488 = vmatprep.subr.mxu0 0.0
        %489 = vmatpush1.msra.mxu0 0.0
        %490 = vmatprep.subr.mxu0 0.0
        %491 = vmatpush1.msra.mxu0 0.0
        %492 = vmatprep.subr.mxu0 0.0
        %493 = vmatpush1.msra.mxu0 0.0
        %494 = vmatprep.subr.mxu0 0.0
        %495 = vmatpush1.msra.mxu0 0.0
        %496 = vmatprep.subr.mxu0 0.0
        %497 = vmatpush1.msra.mxu0 0.0
        %498 = vmatprep.subr.mxu0 0.0
        %499 = vmatpush1.msra.mxu0 %v424
        %500 = vmatprep.subr.mxu0 0.0
        %501 = vmatpush1.msra.mxu0 %v423
        %502 = vmatprep.subr.mxu0 0.0
        %503 = vmatpush1.msra.mxu0 %v422
        %504 = vmatprep.subr.mxu0 0.0
        %505 = vmatpush1.msra.mxu0 %v421
        %506 = vmatprep.subr.mxu0 0.0
        %507 = vmatpush2.msra.mxu0 0.0
        %508 = vmatprep.subr.mxu0 0.0
        %509 = vmatpush2.msra.mxu0 0.0
        %510 = vmatprep.subr.mxu0 0.0
        %511 = vmatpush2.msra.mxu0 0.0
        %512 = vmatprep.subr.mxu0 0.0
        %513 = vmatpush2.msra.mxu0 0.0
        %514 = vmatprep.subr.mxu0 0.0
        %515 = vmatpush2.msra.mxu0 0.0
        %516 = vmatprep.subr.mxu0 0.0
        %517 = vmatpush2.msra.mxu0 0.0
        %518 = vmatprep.subr.mxu0 0.0
        %519 = vmatpush2.msra.mxu0 0.0
        %520 = vmatprep.subr.mxu0 0.0
        %521 = vmatpush2.msra.mxu0 0.0
        %522 = vmatprep.subr.mxu0 0.0
        %523 = vmatpush2.msra.mxu0 0.0
        %524 = vmatprep.subr.mxu0 0.0
        %525 = vmatpush2.msra.mxu0 0.0
        %526 = vmatprep.subr.mxu0 0.0
        %527 = vmatpush2.msra.mxu0 0.0
        %528 = vmatprep.subr.mxu0 0.0
        %529 = vmatpush2.msra.mxu0 0.0
        %530 = vmatprep.subr.mxu0 0.0
        %531 = vmatpush2.msra.mxu0 0.0
        %532 = vmatprep.subr.mxu0 0.0
        %533 = vmatpush2.msra.mxu0 0.0
        %534 = vmatprep.subr.mxu0 0.0
        %535 = vmatpush2.msra.mxu0 0.0
        %536 = vmatprep.subr.mxu0 0.0
        %537 = vmatpush2.msra.mxu0 0.0
        %538 = vmatprep.mubr.f32.mxu0 0.0
        %539 = vmatmul.mubr.f32.gmra.mxu0 %v427
        %v540 = vpop.f32.mrf.mxu0
        %v541 = vadd.f32 0.0, %v540
        %v542 = vpop.f32.mrf.mxu0
        %543 = vmatprep.mubr.f32.mxu0 0.0
        %544 = vmatmul.mubr.f32.gmra.mxu0 %v430
        %v545 = vpop.f32.mrf.mxu0
        %v546 = vadd.f32 0.0, %v545
        %v547 = vpop.f32.mrf.mxu0
        %548 = vmatprep.mubr.f32.mxu0 0.0
        %549 = vmatmul.mubr.f32.gmra.mxu0 %v433
        %v550 = vpop.f32.mrf.mxu0
        %v551 = vadd.f32 0.0, %v550
        %v552 = vpop.f32.mrf.mxu0
        %553 = vmatprep.mubr.f32.mxu0 0.0
        %554 = vmatmul.mubr.f32.gmra.mxu0 %v436
        %v555 = vpop.f32.mrf.mxu0
        %v556 = vadd.f32 0.0, %v555
        %v557 = vpop.f32.mrf.mxu0
        %558 = vmatprep.mubr.f32.mxu0 0.0
        %559 = vmatmul.mubr.f32.gmra.mxu0 %v439
        %v560 = vpop.f32.mrf.mxu0
        %v561 = vadd.f32 0.0, %v560
        %v562 = vpop.f32.mrf.mxu0
        %563 = vmatprep.mubr.f32.mxu0 0.0
        %564 = vmatmul.mubr.f32.gmra.mxu0 %v442
        %v565 = vpop.f32.mrf.mxu0
        %v566 = vadd.f32 0.0, %v565
        %v567 = vpop.f32.mrf.mxu0
        %568 = vmatprep.mubr.f32.mxu0 0.0
        %569 = vmatmul.mubr.f32.gmra.mxu0 %v445
        %v570 = vpop.f32.mrf.mxu0
        %v571 = vadd.f32 0.0, %v570
        %v572 = vpop.f32.mrf.mxu0
        %573 = vmatprep.mubr.f32.mxu0 0.0
        %574 = vmatmul.mubr.f32.gmra.mxu0 %v448
        %v575 = vpop.f32.mrf.mxu0
        %v576 = vadd.f32 0.0, %v575
        %v577 = vpop.f32.mrf.mxu0
        %578 = vmatprep.mubr.f32.mxu0 0.0
        %579 = vmatmul.mubr.f32.gmra.mxu0 %v451
        %v580 = vpop.f32.mrf.mxu0
        %v581 = vadd.f32 0.0, %v580
        %v582 = vpop.f32.mrf.mxu0
        %583 = vmatprep.mubr.f32.mxu0 0.0
        %584 = vmatmul.mubr.f32.gmra.mxu0 %v454
        %v585 = vpop.f32.mrf.mxu0
        %v586 = vadd.f32 0.0, %v585
        %v587 = vpop.f32.mrf.mxu0
        %588 = vmatprep.mubr.f32.mxu0 0.0
        %589 = vmatmul.mubr.f32.gmra.mxu0 %v457
        %v590 = vpop.f32.mrf.mxu0
        %v591 = vadd.f32 0.0, %v590
        %v592 = vpop.f32.mrf.mxu0
        %593 = vmatprep.mubr.f32.mxu0 0.0
        %594 = vmatmul.mubr.f32.gmra.mxu0 %v460
        %v595 = vpop.f32.mrf.mxu0
        %v596 = vadd.f32 0.0, %v595
        %v597 = vpop.f32.mrf.mxu0
        %598 = vmatprep.mubr.f32.mxu0 0.0
        %599 = vmatmul.mubr.f32.gmra.mxu0 %v463
        %v600 = vpop.f32.mrf.mxu0
        %v601 = vadd.f32 0.0, %v600
        %v602 = vpop.f32.mrf.mxu0
        %603 = vmatprep.mubr.f32.mxu0 0.0
        %604 = vmatmul.mubr.f32.gmra.mxu0 %v466
        %v605 = vpop.f32.mrf.mxu0
        %v606 = vadd.f32 0.0, %v605
        %v607 = vpop.f32.mrf.mxu0
        %608 = vmatprep.mubr.f32.mxu0 0.0
        %609 = vmatmul.mubr.f32.gmra.mxu0 %v469
        %v610 = vpop.f32.mrf.mxu0
        %v611 = vadd.f32 0.0, %v610
        %v612 = vpop.f32.mrf.mxu0
        %613 = vmatprep.mubr.f32.mxu0 0.0
        %614 = vmatmul.mubr.f32.gmra.mxu0 %v472
        %v615 = vpop.f32.mrf.mxu0
        %v616 = vadd.f32 0.0, %v615
        %v617 = vpop.f32.mrf.mxu0
        %618 = vdwg.mxu0
        %vm619 = vcmask 31744
        %620 = vst.msk [vmem:[%s207] sm:$0xff] %vm619, %v541
        %621 = vst.msk [vmem:[%s207 + $0x8] sm:$0xff] %vm619, %v546
        %622 = vst.msk [vmem:[%s207 + $0x10] sm:$0xff] %vm619, %v551
        %623 = vst.msk [vmem:[%s207 + $0x18] sm:$0xff] %vm619, %v556
        %624 = vst.msk [vmem:[%s207 + $0x20] sm:$0xff] %vm619, %v561
        %625 = vst.msk [vmem:[%s207 + $0x28] sm:$0xff] %vm619, %v566
        %626 = vst.msk [vmem:[%s207 + $0x30] sm:$0xff] %vm619, %v571
        %627 = vst.msk [vmem:[%s207 + $0x38] sm:$0xff] %vm619, %v576
        %628 = vst.msk [vmem:[%s207 + $0x40] sm:$0xff] %vm619, %v581
        %629 = vst.msk [vmem:[%s207 + $0x48] sm:$0xff] %vm619, %v586
        %630 = vst.msk [vmem:[%s207 + $0x50] sm:$0xff] %vm619, %v591
        %631 = vst.msk [vmem:[%s207 + $0x58] sm:$0xff] %vm619, %v596
        %632 = vst.msk [vmem:[%s207 + $0x60] sm:$0xff] %vm619, %v601
        %633 = vst.msk [vmem:[%s207 + $0x68] sm:$0xff] %vm619, %v606
        %634 = vst.msk [vmem:[%s207 + $0x70] sm:$0xff] %vm619, %v611
        %635 = vst.msk [vmem:[%s207 + $0x78] sm:$0xff] %vm619, %v616
        %636 = vst.msk [vmem:[%s188] sm:$0xff] %vm227, %v343
        %637 = vst.msk [vmem:[%s188 + $0x8] sm:$0xff] %vm227, %v348
        %638 = vst.msk [vmem:[%s188 + $0x10] sm:$0xff] %vm227, %v353
        %639 = vst.msk [vmem:[%s188 + $0x18] sm:$0xff] %vm227, %v358
        %640 = vst.msk [vmem:[%s188 + $0x20] sm:$0xff] %vm227, %v363
        %641 = vst.msk [vmem:[%s188 + $0x28] sm:$0xff] %vm227, %v368
        %642 = vst.msk [vmem:[%s188 + $0x30] sm:$0xff] %vm227, %v373
        %643 = vst.msk [vmem:[%s188 + $0x38] sm:$0xff] %vm227, %v378
        %644 = vst.msk [vmem:[%s188 + $0x40] sm:$0xff] %vm227, %v383
        %645 = vst.msk [vmem:[%s188 + $0x48] sm:$0xff] %vm227, %v388
        %646 = vst.msk [vmem:[%s188 + $0x50] sm:$0xff] %vm227, %v393
        %647 = vst.msk [vmem:[%s188 + $0x58] sm:$0xff] %vm227, %v398
        %648 = vst.msk [vmem:[%s188 + $0x60] sm:$0xff] %vm227, %v403
        %649 = vst.msk [vmem:[%s188 + $0x68] sm:$0xff] %vm227, %v408
        %650 = vst.msk [vmem:[%s188 + $0x70] sm:$0xff] %vm227, %v413
        %651 = vst.msk [vmem:[%s188 + $0x78] sm:$0xff] %vm227, %v418
        %652 = vrot.lane.b32.xlu0 %v343, 112
        %v653 = vpop.permute.xlu0 %652
        %654 = vrot.lane.b32.xlu0 %v348, 112
        %v655 = vpop.permute.xlu0 %654
        %656 = vrot.lane.b32.xlu0 %v353, 112
        %v657 = vpop.permute.xlu0 %656
        %658 = vrot.lane.b32.xlu0 %v358, 112
        %v659 = vpop.permute.xlu0 %658
        %660 = vrot.lane.b32.xlu0 %v363, 112
        %v661 = vpop.permute.xlu0 %660
        %662 = vrot.lane.b32.xlu0 %v368, 112
        %v663 = vpop.permute.xlu0 %662
        %664 = vrot.lane.b32.xlu0 %v373, 112
        %v665 = vpop.permute.xlu0 %664
        %666 = vrot.lane.b32.xlu0 %v378, 112
        %v667 = vpop.permute.xlu0 %666
        %668 = vrot.lane.b32.xlu0 %v383, 112
        %v669 = vpop.permute.xlu0 %668
        %670 = vrot.lane.b32.xlu0 %v388, 112
        %v671 = vpop.permute.xlu0 %670
        %672 = vrot.lane.b32.xlu0 %v393, 112
        %v673 = vpop.permute.xlu0 %672
        %674 = vrot.lane.b32.xlu0 %v398, 112
        %v675 = vpop.permute.xlu0 %674
        %676 = vrot.lane.b32.xlu0 %v403, 112
        %v677 = vpop.permute.xlu0 %676
        %678 = vrot.lane.b32.xlu0 %v408, 112
        %v679 = vpop.permute.xlu0 %678
        %680 = vrot.lane.b32.xlu0 %v413, 112
        %v681 = vpop.permute.xlu0 %680
        %682 = vrot.lane.b32.xlu0 %v418, 112
        %v683 = vpop.permute.xlu0 %682
        %s700 = scalar_lea.vmem %s188, 128 [#allocation2]
        %701 = vst.msk [vmem:[%s700] sm:$0xff] %vm227, %v653
        %702 = vst.msk [vmem:[%s700 + $0x8] sm:$0xff] %vm227, %v655
        %703 = vst.msk [vmem:[%s700 + $0x10] sm:$0xff] %vm227, %v657
        %704 = vst.msk [vmem:[%s700 + $0x18] sm:$0xff] %vm227, %v659
        %705 = vst.msk [vmem:[%s700 + $0x20] sm:$0xff] %vm227, %v661
        %706 = vst.msk [vmem:[%s700 + $0x28] sm:$0xff] %vm227, %v663
        %707 = vst.msk [vmem:[%s700 + $0x30] sm:$0xff] %vm227, %v665
        %708 = vst.msk [vmem:[%s700 + $0x38] sm:$0xff] %vm227, %v667
        %709 = vst.msk [vmem:[%s700 + $0x40] sm:$0xff] %vm227, %v669
        %710 = vst.msk [vmem:[%s700 + $0x48] sm:$0xff] %vm227, %v671
        %711 = vst.msk [vmem:[%s700 + $0x50] sm:$0xff] %vm227, %v673
        %712 = vst.msk [vmem:[%s700 + $0x58] sm:$0xff] %vm227, %v675
        %713 = vst.msk [vmem:[%s700 + $0x60] sm:$0xff] %vm227, %v677
        %714 = vst.msk [vmem:[%s700 + $0x68] sm:$0xff] %vm227, %v679
        %715 = vst.msk [vmem:[%s700 + $0x70] sm:$0xff] %vm227, %v681
        %716 = vst.msk [vmem:[%s700 + $0x78] sm:$0xff] %vm227, %v683
        %s717 = sand.u32 %s92, 1
        %s718 = sand.u32 %s92, 1
        %s719 = smul.addr %s718, 256
        %s720 = scalar_lea.vmem [#allocation2], %s719
        %s721 = smul.u32 16, %s16
        %p722 = scmp.lt.s32.totalorder %s721, 31
        %s723 = scalar_select %p722, %s721, 31
        %s724 = smul.addr %s723, 8
        %s725 = scalar_lea.vmem %s4, %s724
        // Predicated region
        $region33: #{tpu_custom_call.1} parent=31 // pred_check
          %p726 = pneg %p102
        $region34: #{tpu_custom_call.1} parent=31 // pred_check_branch
          %728 = sbr.rel (%p726) target = $region36
        $region35: #{tpu_custom_call.1} parent=31 // pred_region
          %s729 = smul.u32 16, %s16
          %s730 = smul.addr %s729, 8
          %s731 = scalar_lea.vmem %s3, %s730
          // Predicated region
          $region37: #{tpu_custom_call.1} parent=35 // pred_check
            _
          $region38: #{tpu_custom_call.1} parent=35 // pred_check_branch
            %733 = sbr.rel (0) target = $region40
          $region39: #{tpu_custom_call.1} parent=35 // pred_region
            // Predicated region
            $region41: #{tpu_custom_call.1} parent=39 // pred_check
              _
            $region42: #{tpu_custom_call.1} parent=39 // pred_check_branch
              %735 = sbr.rel (0) target = $region44
            $region43: #{tpu_custom_call.1} parent=39 // pred_region
              // Predicated region
              $region56: #{tpu_custom_call.1} parent=43 // pred_check
                _
              $region57: #{tpu_custom_call.1} parent=43 // pred_check_branch
                %813 = sbr.rel (0) target = $region59
              $region58: #{tpu_custom_call.1} parent=43 // pred_region
                loop: start=0, step=1, limit=1
                $region60: #{tpu_custom_call.1} parent=58 // loop_pre_header
                  _
                $region61: #{tpu_custom_call.1} parent=58 // loop_header
                  %s815 = sphi 0, %s819
                  %p816 = scmp.ge.s32.totalorder %s815, 1
                  %s820 = sphi %s720, %s720
                  %s821 = sphi %s731, %s731
                $region62: #{tpu_custom_call.1} parent=58 // loop_header_branch
                  %818 = sbr.rel (%p816) target = $region66
                $region63: #{tpu_custom_call.1} parent=58 // loop_body
                  %v822 = vld [vmem:[%s820] sm:$0xff]
                  %823 = vst [vmem:[%s821] sm:$0xff] %v822
                  %v824 = vld [vmem:[%s820 + $0x8] sm:$0xff]
                  %825 = vst [vmem:[%s821 + $0x8] sm:$0xff] %v824
                  %v826 = vld [vmem:[%s820 + $0x10] sm:$0xff]
                  %827 = vst [vmem:[%s821 + $0x10] sm:$0xff] %v826
                  %v828 = vld [vmem:[%s820 + $0x18] sm:$0xff]
                  %829 = vst [vmem:[%s821 + $0x18] sm:$0xff] %v828
                  %v830 = vld [vmem:[%s820 + $0x20] sm:$0xff]
                  %831 = vst [vmem:[%s821 + $0x20] sm:$0xff] %v830
                  %v832 = vld [vmem:[%s820 + $0x28] sm:$0xff]
                  %833 = vst [vmem:[%s821 + $0x28] sm:$0xff] %v832
                  %v834 = vld [vmem:[%s820 + $0x30] sm:$0xff]
                  %835 = vst [vmem:[%s821 + $0x30] sm:$0xff] %v834
                  %v836 = vld [vmem:[%s820 + $0x38] sm:$0xff]
                  %837 = vst [vmem:[%s821 + $0x38] sm:$0xff] %v836
                  %v838 = vld [vmem:[%s820 + $0x40] sm:$0xff]
                  %839 = vst [vmem:[%s821 + $0x40] sm:$0xff] %v838
                  %v840 = vld [vmem:[%s820 + $0x48] sm:$0xff]
                  %841 = vst [vmem:[%s821 + $0x48] sm:$0xff] %v840
                  %v842 = vld [vmem:[%s820 + $0x50] sm:$0xff]
                  %843 = vst [vmem:[%s821 + $0x50] sm:$0xff] %v842
                  %v844 = vld [vmem:[%s820 + $0x58] sm:$0xff]
                  %845 = vst [vmem:[%s821 + $0x58] sm:$0xff] %v844
                  %v846 = vld [vmem:[%s820 + $0x60] sm:$0xff]
                  %847 = vst [vmem:[%s821 + $0x60] sm:$0xff] %v846
                  %v848 = vld [vmem:[%s820 + $0x68] sm:$0xff]
                  %849 = vst [vmem:[%s821 + $0x68] sm:$0xff] %v848
                  %v850 = vld [vmem:[%s820 + $0x70] sm:$0xff]
                  %851 = vst [vmem:[%s821 + $0x70] sm:$0xff] %v850
                  %v852 = vld [vmem:[%s820 + $0x78] sm:$0xff]
                  %853 = vst [vmem:[%s821 + $0x78] sm:$0xff] %v852
                  %v854 = vld [vmem:[%s820 + $0x80] sm:$0xff]
                  %855 = vst [vmem:[%s821 + $0x100] sm:$0xff] %v854
                  %v856 = vld [vmem:[%s820 + $0x88] sm:$0xff]
                  %857 = vst [vmem:[%s821 + $0x108] sm:$0xff] %v856
                  %v858 = vld [vmem:[%s820 + $0x90] sm:$0xff]
                  %859 = vst [vmem:[%s821 + $0x110] sm:$0xff] %v858
                  %v860 = vld [vmem:[%s820 + $0x98] sm:$0xff]
                  %861 = vst [vmem:[%s821 + $0x118] sm:$0xff] %v860
                  %v862 = vld [vmem:[%s820 + $0xa0] sm:$0xff]
                  %863 = vst [vmem:[%s821 + $0x120] sm:$0xff] %v862
                  %v864 = vld [vmem:[%s820 + $0xa8] sm:$0xff]
                  %865 = vst [vmem:[%s821 + $0x128] sm:$0xff] %v864
                  %v866 = vld [vmem:[%s820 + $0xb0] sm:$0xff]
                  %867 = vst [vmem:[%s821 + $0x130] sm:$0xff] %v866
                  %v868 = vld [vmem:[%s820 + $0xb8] sm:$0xff]
                  %869 = vst [vmem:[%s821 + $0x138] sm:$0xff] %v868
                  %v870 = vld [vmem:[%s820 + $0xc0] sm:$0xff]
                  %871 = vst [vmem:[%s821 + $0x140] sm:$0xff] %v870
                  %v872 = vld [vmem:[%s820 + $0xc8] sm:$0xff]
                  %873 = vst [vmem:[%s821 + $0x148] sm:$0xff] %v872
                  %v874 = vld [vmem:[%s820 + $0xd0] sm:$0xff]
                  %875 = vst [vmem:[%s821 + $0x150] sm:$0xff] %v874
                  %v876 = vld [vmem:[%s820 + $0xd8] sm:$0xff]
                  %877 = vst [vmem:[%s821 + $0x158] sm:$0xff] %v876
                  %v878 = vld [vmem:[%s820 + $0xe0] sm:$0xff]
                  %879 = vst [vmem:[%s821 + $0x160] sm:$0xff] %v878
                  %v880 = vld [vmem:[%s820 + $0xe8] sm:$0xff]
                  %881 = vst [vmem:[%s821 + $0x168] sm:$0xff] %v880
                  %v882 = vld [vmem:[%s820 + $0xf0] sm:$0xff]
                  %883 = vst [vmem:[%s821 + $0x170] sm:$0xff] %v882
                  %v884 = vld [vmem:[%s820 + $0xf8] sm:$0xff]
                  %885 = vst [vmem:[%s821 + $0x178] sm:$0xff] %v884
                $region64: #{tpu_custom_call.1} parent=58 // loop_footer
                  %s819 = sadd.s32 1, %s815
                $region65: #{tpu_custom_call.1} parent=58 // loop_footer_branch
                  %814 = sbr.rel target = $region61
                $region66: #{tpu_custom_call.1} parent=58 // loop_exit
                  _
              $region59: #{tpu_custom_call.1} parent=43 // pred_fallthru
                _
              // Predicated region
              $region67: #{tpu_custom_call.1} parent=43 // pred_check
                _
              $region68: #{tpu_custom_call.1} parent=43 // pred_check_branch
                %887 = sbr.rel target = $region70
              $region69: #{tpu_custom_call.1} parent=43 // pred_region
                _
              $region70: #{tpu_custom_call.1} parent=43 // pred_fallthru
                _
            $region44: #{tpu_custom_call.1} parent=39 // pred_fallthru
              _
            // Predicated region
            $region45: #{tpu_custom_call.1} parent=39 // pred_check
              _
            $region46: #{tpu_custom_call.1} parent=39 // pred_check_branch
              %737 = sbr.rel target = $region48
            $region47: #{tpu_custom_call.1} parent=39 // pred_region
              %s739 = ssub.s32 256, 1
              loop: start=0, step=1, limit=1
              $region49: #{tpu_custom_call.1} parent=47 // loop_pre_header
                _
              $region50: #{tpu_custom_call.1} parent=47 // loop_header
                %s741 = sphi 0, %s745
                %p742 = scmp.ge.s32.totalorder %s741, 1
                %s746 = sphi %s720, %s720
                %s747 = sphi %s731, %s731
              $region51: #{tpu_custom_call.1} parent=47 // loop_header_branch
                %744 = sbr.rel (%p742) target = $region55
              $region52: #{tpu_custom_call.1} parent=47 // loop_body
                %v748 = vld [vmem:[%s746] sm:%s739]
                %749 = vst [vmem:[%s747] sm:%s739] %v748
                %v750 = vld [vmem:[%s746 + $0x8] sm:%s739]
                %751 = vst [vmem:[%s747 + $0x8] sm:%s739] %v750
                %v752 = vld [vmem:[%s746 + $0x10] sm:%s739]
                %753 = vst [vmem:[%s747 + $0x10] sm:%s739] %v752
                %v754 = vld [vmem:[%s746 + $0x18] sm:%s739]
                %755 = vst [vmem:[%s747 + $0x18] sm:%s739] %v754
                %v756 = vld [vmem:[%s746 + $0x20] sm:%s739]
                %757 = vst [vmem:[%s747 + $0x20] sm:%s739] %v756
                %v758 = vld [vmem:[%s746 + $0x28] sm:%s739]
                %759 = vst [vmem:[%s747 + $0x28] sm:%s739] %v758
                %v760 = vld [vmem:[%s746 + $0x30] sm:%s739]
                %761 = vst [vmem:[%s747 + $0x30] sm:%s739] %v760
                %v762 = vld [vmem:[%s746 + $0x38] sm:%s739]
                %763 = vst [vmem:[%s747 + $0x38] sm:%s739] %v762
                %v764 = vld [vmem:[%s746 + $0x40] sm:%s739]
                %765 = vst [vmem:[%s747 + $0x40] sm:%s739] %v764
                %v766 = vld [vmem:[%s746 + $0x48] sm:%s739]
                %767 = vst [vmem:[%s747 + $0x48] sm:%s739] %v766
                %v768 = vld [vmem:[%s746 + $0x50] sm:%s739]
                %769 = vst [vmem:[%s747 + $0x50] sm:%s739] %v768
                %v770 = vld [vmem:[%s746 + $0x58] sm:%s739]
                %771 = vst [vmem:[%s747 + $0x58] sm:%s739] %v770
                %v772 = vld [vmem:[%s746 + $0x60] sm:%s739]
                %773 = vst [vmem:[%s747 + $0x60] sm:%s739] %v772
                %v774 = vld [vmem:[%s746 + $0x68] sm:%s739]
                %775 = vst [vmem:[%s747 + $0x68] sm:%s739] %v774
                %v776 = vld [vmem:[%s746 + $0x70] sm:%s739]
                %777 = vst [vmem:[%s747 + $0x70] sm:%s739] %v776
                %v778 = vld [vmem:[%s746 + $0x78] sm:%s739]
                %779 = vst [vmem:[%s747 + $0x78] sm:%s739] %v778
                %v780 = vld [vmem:[%s746 + $0x80] sm:%s739]
                %781 = vst [vmem:[%s747 + $0x100] sm:%s739] %v780
                %v782 = vld [vmem:[%s746 + $0x88] sm:%s739]
                %783 = vst [vmem:[%s747 + $0x108] sm:%s739] %v782
                %v784 = vld [vmem:[%s746 + $0x90] sm:%s739]
                %785 = vst [vmem:[%s747 + $0x110] sm:%s739] %v784
                %v786 = vld [vmem:[%s746 + $0x98] sm:%s739]
                %787 = vst [vmem:[%s747 + $0x118] sm:%s739] %v786
                %v788 = vld [vmem:[%s746 + $0xa0] sm:%s739]
                %789 = vst [vmem:[%s747 + $0x120] sm:%s739] %v788
                %v790 = vld [vmem:[%s746 + $0xa8] sm:%s739]
                %791 = vst [vmem:[%s747 + $0x128] sm:%s739] %v790
                %v792 = vld [vmem:[%s746 + $0xb0] sm:%s739]
                %793 = vst [vmem:[%s747 + $0x130] sm:%s739] %v792
                %v794 = vld [vmem:[%s746 + $0xb8] sm:%s739]
                %795 = vst [vmem:[%s747 + $0x138] sm:%s739] %v794
                %v796 = vld [vmem:[%s746 + $0xc0] sm:%s739]
                %797 = vst [vmem:[%s747 + $0x140] sm:%s739] %v796
                %v798 = vld [vmem:[%s746 + $0xc8] sm:%s739]
                %799 = vst [vmem:[%s747 + $0x148] sm:%s739] %v798
                %v800 = vld [vmem:[%s746 + $0xd0] sm:%s739]
                %801 = vst [vmem:[%s747 + $0x150] sm:%s739] %v800
                %v802 = vld [vmem:[%s746 + $0xd8] sm:%s739]
                %803 = vst [vmem:[%s747 + $0x158] sm:%s739] %v802
                %v804 = vld [vmem:[%s746 + $0xe0] sm:%s739]
                %805 = vst [vmem:[%s747 + $0x160] sm:%s739] %v804
                %v806 = vld [vmem:[%s746 + $0xe8] sm:%s739]
                %807 = vst [vmem:[%s747 + $0x168] sm:%s739] %v806
                %v808 = vld [vmem:[%s746 + $0xf0] sm:%s739]
                %809 = vst [vmem:[%s747 + $0x170] sm:%s739] %v808
                %v810 = vld [vmem:[%s746 + $0xf8] sm:%s739]
                %811 = vst [vmem:[%s747 + $0x178] sm:%s739] %v810
              $region53: #{tpu_custom_call.1} parent=47 // loop_footer
                %s745 = sadd.s32 1, %s741
              $region54: #{tpu_custom_call.1} parent=47 // loop_footer_branch
                %740 = sbr.rel target = $region50
              $region55: #{tpu_custom_call.1} parent=47 // loop_exit
                _
            $region48: #{tpu_custom_call.1} parent=39 // pred_fallthru
              _
          $region40: #{tpu_custom_call.1} parent=35 // pred_fallthru
            _
          %888 = vnop
        $region36: #{tpu_custom_call.1} parent=31 // pred_fallthru
          _
        // Predicated region
        $region71: #{tpu_custom_call.1} parent=31 // pred_check
          %p889 = pneg %p128
        $region72: #{tpu_custom_call.1} parent=31 // pred_check_branch
          %891 = sbr.rel (%p889) target = $region74
        $region73: #{tpu_custom_call.1} parent=31 // pred_region
          %s892 = smul.u32 16, %s16
        $region74: #{tpu_custom_call.1} parent=31 // pred_fallthru
          _
      $region32: #{tpu_custom_call.1} parent=5 // pred_fallthru
        _
      %p893 = scmp.le.s32.totalorder 2, %s11
      // Predicated region
      $region75: #{tpu_custom_call.1} parent=5 // pred_check
        %p894 = pneg %p893
      $region76: #{tpu_custom_call.1} parent=5 // pred_check_branch
        %896 = sbr.rel (%p894) target = $region78
      $region77: #{tpu_custom_call.1} parent=5 // pred_region
        %s897 = ssub.s32 %s11, 2
        // Predicated region
        $region79: #{tpu_custom_call.1} parent=77 // pred_check
          %p898 = pneg %p108
        $region80: #{tpu_custom_call.1} parent=77 // pred_check_branch
          %900 = sbr.rel (%p898) target = $region82
        $region81: #{tpu_custom_call.1} parent=77 // pred_region
          %s901 = sand.u32 %s93, 1
          %s902 = sand.u32 %s93, 1
          %s903 = smul.addr %s902, 256
          %s904 = scalar_lea.vmem [#allocation2], %s903
        $region82: #{tpu_custom_call.1} parent=77 // pred_fallthru
          _
        // Predicated region
        $region83: #{tpu_custom_call.1} parent=77 // pred_check
          %p905 = pneg %p134
        $region84: #{tpu_custom_call.1} parent=77 // pred_check_branch
          %907 = sbr.rel (%p905) target = $region86
        $region85: #{tpu_custom_call.1} parent=77 // pred_region
          %s908 = smul.u32 16, %s17
          %p909 = scmp.lt.s32.totalorder %s908, 31
          %s910 = scalar_select %p909, %s908, 31
          %s911 = smul.addr %s910, 8
          %s912 = scalar_lea.vmem %s4, %s911
        $region86: #{tpu_custom_call.1} parent=77 // pred_fallthru
          _
      $region78: #{tpu_custom_call.1} parent=5 // pred_fallthru
        _
    $region6: #{tpu_custom_call.1} parent=1 // loop_footer
      %s15 = sadd.s32 1, %s11
    $region7: #{tpu_custom_call.1} parent=1 // loop_footer_branch
      %10 = sbr.rel target = $region3
    $region8: #{tpu_custom_call.1} parent=1 // loop_exit
      _

</llo_original>
